<compile_context>
chip_gen: v6e
topology: v6e:2x2x1
jax: 0.10.0
libtpu: 0.0.40
codegen_flags: <defaults>
</compile_context>

<pallas_src>
import functools

import jax
import jax.numpy as jnp
from jax import lax
from jax.experimental import pallas as pl
from jax.experimental.pallas import tpu as pltpu

N_JOINTS = 21
QUAT = 4
IN_DIM = N_JOINTS * QUAT  # 84
HIDDEN = 64
TILE_B = 512              # default batch tile (tunable; multiple of 8)


def posendf_kernel(pose_ref, mask_ref, w1_ref, b1_ref, w2_ref, b2_ref,
                   w3_ref, b3_ref, out_ref):
    # pose_ref: (tile_b, 84)   flattened, lane-dense.
    x = pose_ref[...].astype(jnp.float32)
    mask = mask_ref[...]                                   # (84, 4)

    # F.normalize(pose, dim=1): L2 norm over the 21 joints per quaternion
    # component, clamped at eps=1e-12, done entirely in the flat layout.
    ssq = jnp.dot(x * x, mask, preferred_element_type=jnp.float32)   # (tile_b, 4)
    nrm = jnp.maximum(jnp.sqrt(ssq), 1e-12)                           # (tile_b, 4)
    # Expand the per-component norm back to all 84 lanes: div[i, j*4+q] = nrm[i, q].
    div = lax.dot_general(nrm, mask, (((1,), (1,)), ((), ())),
                          preferred_element_type=jnp.float32)         # (tile_b, 84)
    xn = x / div

    # DFNet MLP (f32 accumulation on the MXU).
    h = jnp.dot(xn, w1_ref[...], preferred_element_type=jnp.float32)
    h = jnp.maximum(h + b1_ref[...], 0.0)                             # (tile_b, H)

    h = jnp.dot(h, w2_ref[...], preferred_element_type=jnp.float32)
    h = jnp.maximum(h + b2_ref[...], 0.0)                             # (tile_b, H)

    # Final layer: w3 is a (1, H) row; contract the hidden axis of both so the
    # result is (1, tile_b) — batch on the lane axis, unmasked lane-dense store.
    d = lax.dot_general(w3_ref[...], h, (((1,), (1,)), ((), ())),
                        preferred_element_type=jnp.float32)           # (1, tile_b)
    out_ref[...] = (d + b3_ref[...]).astype(out_ref.dtype)


@functools.partial(jax.jit, static_argnames=("tile_b",))
def posendf_forward(pose, params, tile_b=TILE_B):
    """Eval-mode PoseNDF forward. pose: (..., 21*4) or (B, 21, 4)."""
    pose = pose.reshape(-1, IN_DIM).astype(jnp.float32)   # flatten once, here
    B = pose.shape[0]
    b_pad = pl.cdiv(B, tile_b) * tile_b
    if b_pad != B:
        pose = jnp.pad(pose, ((0, b_pad - B), (0, 0)))

    # (84, 4) component-selector mask: mask[k, q] = 1 iff k % 4 == q.
    mask = (jnp.arange(IN_DIM, dtype=jnp.int32)[:, None] % QUAT
            == jnp.arange(QUAT, dtype=jnp.int32)[None, :]).astype(jnp.float32)

    w1, b1, w2, b2, w3, b3 = (params["w1"], params["b1"], params["w2"],
                              params["b2"], params["w3"], params["b3"])

    const = lambda i: (0, 0)   # resident blocks (weights / mask)

    out = pl.pallas_call(
        posendf_kernel,
        out_shape=jax.ShapeDtypeStruct((1, b_pad), jnp.float32),
        grid_spec=pltpu.PrefetchScalarGridSpec(
            num_scalar_prefetch=0,
            grid=(b_pad // tile_b,),
            in_specs=[
                pl.BlockSpec((tile_b, IN_DIM), lambda i: (i, 0)),   # pose stream
                pl.BlockSpec((IN_DIM, QUAT), const),                # mask
                pl.BlockSpec((IN_DIM, HIDDEN), const),              # w1
                pl.BlockSpec((1, HIDDEN), const),                   # b1
                pl.BlockSpec((HIDDEN, HIDDEN), const),              # w2
                pl.BlockSpec((1, HIDDEN), const),                   # b2
                pl.BlockSpec((1, HIDDEN), const),                   # w3 (row)
                pl.BlockSpec((1, 1), const),                        # b3
            ],
            out_specs=pl.BlockSpec((1, tile_b), lambda i: (0, i)),  # lane-dense
        ),
        compiler_params=pltpu.CompilerParams(
            dimension_semantics=("parallel",)),
    )(pose, mask, w1, b1, w2, b2, w3, b3)

    dist_pred = out[0, :B].reshape(B, 1)
    return {"dist_pred": dist_pred}


def init_params(key):
    """Deterministic synthetic DFNet weights; w's are (in, out), w3 is a (1, H) row."""
    k1, k2, k3 = jax.random.split(key, 3)
    scale1 = 1.0 / jnp.sqrt(IN_DIM)
    scale2 = 1.0 / jnp.sqrt(HIDDEN)
    return {
        "w1": jax.random.normal(k1, (IN_DIM, HIDDEN), jnp.float32) * scale1,
        "b1": jnp.zeros((1, HIDDEN), jnp.float32),
        "w2": jax.random.normal(k2, (HIDDEN, HIDDEN), jnp.float32) * scale2,
        "b2": jnp.zeros((1, HIDDEN), jnp.float32),
        "w3": jax.random.normal(k3, (1, HIDDEN), jnp.float32) * scale2,
        "b3": jnp.zeros((1, 1), jnp.float32),
    }


def reference_forward(pose, params):
    """Pure-JAX reference for correctness checking."""
    pose = pose.reshape(-1, N_JOINTS, QUAT)
    nrm = jnp.maximum(jnp.sqrt(jnp.sum(pose * pose, axis=1, keepdims=True)),
                      1e-12)
    x = (pose / nrm).reshape(pose.shape[0], IN_DIM)
    h = jnp.maximum(x @ params["w1"] + params["b1"], 0.0)
    h = jnp.maximum(h @ params["w2"] + params["b2"], 0.0)
    return h @ params["w3"].T + params["b3"]


if __name__ == "__main__":
    key = jax.random.PRNGKey(0)
    k_pose, k_params = jax.random.split(key)

    B = 256          # small test batch
    tile_b = 128     # keep the grid >= 2 steps (v7x has 2 TensorCores)
    pose = jax.random.normal(k_pose, (B, N_JOINTS, QUAT), jnp.float32)
    params = init_params(k_params)

    out = posendf_forward(pose, params, tile_b=tile_b)
    dist_pred = jax.block_until_ready(out["dist_pred"])

    ref = reference_forward(pose, params)
    assert dist_pred.shape == (B, 1)
    assert jnp.allclose(dist_pred, ref, atol=1e-4, rtol=1e-4)

    print("KERNEL_OK")
</pallas_src>

<mosaic_0001>
module attributes {stable_mosaic.version = 11 : i64} {
  func.func @posendf_kernel(%arg0: i32, %arg1: memref<128x84xf32, #tpu.memory_space<vmem>>, %arg2: memref<84x4xf32, #tpu.memory_space<vmem>>, %arg3: memref<84x64xf32, #tpu.memory_space<vmem>>, %arg4: memref<1x64xf32, #tpu.memory_space<vmem>>, %arg5: memref<64x64xf32, #tpu.memory_space<vmem>>, %arg6: memref<1x64xf32, #tpu.memory_space<vmem>>, %arg7: memref<1x64xf32, #tpu.memory_space<vmem>>, %arg8: memref<1x1xf32, #tpu.memory_space<vmem>>, %arg9: memref<1x128xf32, #tpu.memory_space<vmem>>) attributes {dimension_semantics = [#tpu.dimension_semantics<parallel>], iteration_bounds = array<i64: 2>, scalar_prefetch = 0 : i64, scratch_operands = 0 : i64, tpu.core_type = #tpu.core_type<tc>, window_params = [{transform_indices = @transform_0, window_bounds = array<i64: 128, 84>}, {pipeline_mode = #tpu.pipeline_mode<synchronous>, transform_indices = @transform_1, window_bounds = array<i64: 84, 4>}, {pipeline_mode = #tpu.pipeline_mode<synchronous>, transform_indices = @transform_2, window_bounds = array<i64: 84, 64>}, {pipeline_mode = #tpu.pipeline_mode<synchronous>, transform_indices = @transform_3, window_bounds = array<i64: 1, 64>}, {pipeline_mode = #tpu.pipeline_mode<synchronous>, transform_indices = @transform_4, window_bounds = array<i64: 64, 64>}, {pipeline_mode = #tpu.pipeline_mode<synchronous>, transform_indices = @transform_5, window_bounds = array<i64: 1, 64>}, {pipeline_mode = #tpu.pipeline_mode<synchronous>, transform_indices = @transform_6, window_bounds = array<i64: 1, 64>}, {pipeline_mode = #tpu.pipeline_mode<synchronous>, transform_indices = @transform_7, window_bounds = array<i64: 1, 1>}, {transform_indices = @transform_8, window_bounds = array<i64: 1, 128>}]} {
    %c0 = arith.constant 0 : index
    %c0_0 = arith.constant 0 : index
    %0 = vector.load %arg1[%c0, %c0_0] : memref<128x84xf32, #tpu.memory_space<vmem>>, vector<128x84xf32>
    %c0_1 = arith.constant 0 : index
    %c0_2 = arith.constant 0 : index
    %1 = vector.load %arg2[%c0_1, %c0_2] : memref<84x4xf32, #tpu.memory_space<vmem>>, vector<84x4xf32>
    %2 = arith.mulf %0, %0 : vector<128x84xf32>
    %cst = arith.constant dense<0.000000e+00> : vector<128x4xf32>
    %3 = tpu.matmul %2, %1, %cst {dimension_numbers = #tpu.dot_dimension_numbers<[1], [0], [0], [1], [0, 0, 1, 1], [], []>} : vector<128x84xf32>, vector<84x4xf32>, vector<128x4xf32> -> vector<128x4xf32>
    %4 = math.sqrt %3 : vector<128x4xf32>
    %cst_3 = arith.constant 9.99999996E-13 : f32
    %5 = vector.broadcast %cst_3 : f32 to vector<128x4xf32>
    %6 = arith.maximumf %4, %5 : vector<128x4xf32>
    %cst_4 = arith.constant dense<0.000000e+00> : vector<128x84xf32>
    %7 = tpu.matmul %6, %1, %cst_4 {dimension_numbers = #tpu.dot_dimension_numbers<[1], [1], [0], [0], [0, 0, 1, 0], [], []>} : vector<128x4xf32>, vector<84x4xf32>, vector<128x84xf32> -> vector<128x84xf32>
    %8 = arith.divf %0, %7 : vector<128x84xf32>
    %c0_5 = arith.constant 0 : index
    %c0_6 = arith.constant 0 : index
    %9 = vector.load %arg3[%c0_5, %c0_6] : memref<84x64xf32, #tpu.memory_space<vmem>>, vector<84x64xf32>
    %cst_7 = arith.constant dense<0.000000e+00> : vector<128x64xf32>
    %10 = tpu.matmul %8, %9, %cst_7 {dimension_numbers = #tpu.dot_dimension_numbers<[1], [0], [0], [1], [0, 0, 1, 1], [], []>} : vector<128x84xf32>, vector<84x64xf32>, vector<128x64xf32> -> vector<128x64xf32>
    %c0_8 = arith.constant 0 : index
    %c0_9 = arith.constant 0 : index
    %11 = vector.load %arg4[%c0_8, %c0_9] : memref<1x64xf32, #tpu.memory_space<vmem>>, vector<1x64xf32>
    %12 = vector.broadcast %11 : vector<1x64xf32> to vector<128x64xf32>
    %13 = arith.addf %10, %12 : vector<128x64xf32>
    %cst_10 = arith.constant 0.000000e+00 : f32
    %14 = vector.broadcast %cst_10 : f32 to vector<128x64xf32>
    %15 = arith.maximumf %13, %14 : vector<128x64xf32>
    %c0_11 = arith.constant 0 : index
    %c0_12 = arith.constant 0 : index
    %16 = vector.load %arg5[%c0_11, %c0_12] : memref<64x64xf32, #tpu.memory_space<vmem>>, vector<64x64xf32>
    %cst_13 = arith.constant dense<0.000000e+00> : vector<128x64xf32>
    %17 = tpu.matmul %15, %16, %cst_13 {dimension_numbers = #tpu.dot_dimension_numbers<[1], [0], [0], [1], [0, 0, 1, 1], [], []>} : vector<128x64xf32>, vector<64x64xf32>, vector<128x64xf32> -> vector<128x64xf32>
    %c0_14 = arith.constant 0 : index
    %c0_15 = arith.constant 0 : index
    %18 = vector.load %arg6[%c0_14, %c0_15] : memref<1x64xf32, #tpu.memory_space<vmem>>, vector<1x64xf32>
    %19 = vector.broadcast %18 : vector<1x64xf32> to vector<128x64xf32>
    %20 = arith.addf %17, %19 : vector<128x64xf32>
    %cst_16 = arith.constant 0.000000e+00 : f32
    %21 = vector.broadcast %cst_16 : f32 to vector<128x64xf32>
    %22 = arith.maximumf %20, %21 : vector<128x64xf32>
    %c0_17 = arith.constant 0 : index
    %c0_18 = arith.constant 0 : index
    %23 = vector.load %arg7[%c0_17, %c0_18] : memref<1x64xf32, #tpu.memory_space<vmem>>, vector<1x64xf32>
    %cst_19 = arith.constant dense<0.000000e+00> : vector<1x128xf32>
    %24 = tpu.matmul %23, %22, %cst_19 {dimension_numbers = #tpu.dot_dimension_numbers<[1], [1], [0], [0], [0, 0, 1, 0], [], []>} : vector<1x64xf32>, vector<128x64xf32>, vector<1x128xf32> -> vector<1x128xf32>
    %c0_20 = arith.constant 0 : index
    %c0_21 = arith.constant 0 : index
    %25 = vector.load %arg8[%c0_20, %c0_21] : memref<1x1xf32, #tpu.memory_space<vmem>>, vector<1x1xf32>
    %26 = vector.broadcast %25 : vector<1x1xf32> to vector<1x128xf32>
    %27 = arith.addf %24, %26 : vector<1x128xf32>
    %c0_22 = arith.constant 0 : index
    %c0_23 = arith.constant 0 : index
    %28 = vector.load %arg9[%c0_22, %c0_23] : memref<1x128xf32, #tpu.memory_space<vmem>>, vector<1x128xf32>
    tpu.vector_store %arg9[%c0_22, %c0_23], %27 {strides = array<i32>} : memref<1x128xf32, #tpu.memory_space<vmem>>, vector<1x128xf32>,
    return
  }
  func.func @transform_0(%arg0: i32) -> (i32, i32) {
    %c0_i32 = arith.constant 0 : i32
    %c0_i32_0 = arith.constant 0 : i32
    return %arg0, %c0_i32 : i32, i32
  }
  func.func @transform_1(%arg0: i32) -> (i32, i32) {
    %c0_i32 = arith.constant 0 : i32
    %c0_i32_0 = arith.constant 0 : i32
    %c0_i32_1 = arith.constant 0 : i32
    return %c0_i32, %c0_i32_0 : i32, i32
  }
  func.func @transform_2(%arg0: i32) -> (i32, i32) {
    %c0_i32 = arith.constant 0 : i32
    %c0_i32_0 = arith.constant 0 : i32
    %c0_i32_1 = arith.constant 0 : i32
    return %c0_i32, %c0_i32_0 : i32, i32
  }
  func.func @transform_3(%arg0: i32) -> (i32, i32) {
    %c0_i32 = arith.constant 0 : i32
    %c0_i32_0 = arith.constant 0 : i32
    %c0_i32_1 = arith.constant 0 : i32
    return %c0_i32, %c0_i32_0 : i32, i32
  }
  func.func @transform_4(%arg0: i32) -> (i32, i32) {
    %c0_i32 = arith.constant 0 : i32
    %c0_i32_0 = arith.constant 0 : i32
    %c0_i32_1 = arith.constant 0 : i32
    return %c0_i32, %c0_i32_0 : i32, i32
  }
  func.func @transform_5(%arg0: i32) -> (i32, i32) {
    %c0_i32 = arith.constant 0 : i32
    %c0_i32_0 = arith.constant 0 : i32
    %c0_i32_1 = arith.constant 0 : i32
    return %c0_i32, %c0_i32_0 : i32, i32
  }
  func.func @transform_6(%arg0: i32) -> (i32, i32) {
    %c0_i32 = arith.constant 0 : i32
    %c0_i32_0 = arith.constant 0 : i32
    %c0_i32_1 = arith.constant 0 : i32
    return %c0_i32, %c0_i32_0 : i32, i32
  }
  func.func @transform_7(%arg0: i32) -> (i32, i32) {
    %c0_i32 = arith.constant 0 : i32
    %c0_i32_0 = arith.constant 0 : i32
    %c0_i32_1 = arith.constant 0 : i32
    return %c0_i32, %c0_i32_0 : i32, i32
  }
  func.func @transform_8(%arg0: i32) -> (i32, i32) {
    %c0_i32 = arith.constant 0 : i32
    %c0_i32_0 = arith.constant 0 : i32
    return %c0_i32, %arg0 : i32, i32
  }
}

</mosaic_0001>

<llo_original>
// kernel: posendf_forward.1
$region0: #{posendf_forward.1}
  #allocation0 [shape = 'u32[]', space=smem, size = 0x4, offset = 0x4, fixed_abs, tag = 'smem constant byte address 0x4 - core index']
  #allocation1 [shape = 'u32[144,128]{1,0:T(1,128)}', space=vmem, size = 0x12000, scoped, tag = 'internal scratch']
  #allocation2 [shape = 'f32[1,1]{1,0:T(1,128)S(1)}', space=vmem, size = 0x200, scoped, tag = 'scoped memory for posendf_forward.1']
  %s0 = inlined_call_operand.vmem [shape: f32[256,84], index: 0, kind: input, shape index: {}]
  %s1 = inlined_call_operand.vmem [shape: f32[84,4], index: 1, kind: input, shape index: {}]
  %s2 = inlined_call_operand.vmem [shape: f32[84,64], index: 2, kind: input, shape index: {}]
  %s3 = inlined_call_operand.vmem [shape: f32[1,64], index: 3, kind: input, shape index: {}]
  %s4 = inlined_call_operand.vmem [shape: f32[64,64], index: 4, kind: input, shape index: {}]
  %s5 = inlined_call_operand.vmem [shape: f32[1,64], index: 5, kind: input, shape index: {}]
  %s6 = inlined_call_operand.vmem [shape: f32[1,64], index: 6, kind: input, shape index: {}]
  %s7 = inlined_call_operand.<no memory space> [shape: f32[1,1], index: 7, kind: input, shape index: {}]
  %s8 = inlined_call_operand.hbm [shape: f32[1,256], index: 8, kind: output, shape index: {}]
  %s9 = sld [smem:[#allocation0]]
  $region65: #{posendf_forward.1} parent=0
    _
  %s11 = ssub.s32 1, %s9
  %s12 = scalar_select 0, %s11, %s9
  %v13 = vstv %s7
  %14 = vst [vmem:[#allocation2] sm:$0x1] %v13
  $region1: #{posendf_forward.1} parent=0
    #allocation3 [shape = 'u8[1024]{0}', space=vmem, size = 0x400, scoped, tag = 'output window, operand 0']
    #allocation4 [shape = 's32[2]{0}', space=sflag, size = 0x8, scoped, tag = 'scoped memory for posendf_forward.1']
    %15 = vsyncpa [#allocation4], 0
    %s16 = scalar_lea.sflag [#allocation4], 1
    %17 = vsyncpa %s16, 0
    loop: start=0, step=1, limit=4
    $region2: #{posendf_forward.1} parent=1 // loop_pre_header
      _
    $region3: #{posendf_forward.1} parent=1 // loop_header
      %s19 = sphi 0, %s23
      %p20 = scmp.ge.s32.totalorder %s19, 4
      %s29 = sphi 0, %s31
      %s32 = sphi 0, %s29
      %s33 = sphi 0, %s32
      %s49 = sphi 0, %s33
      %s53 = sphi 0, %s53
      %s55 = sphi 0, %s53
      %s56 = sphi 0, %s55
      %s70 = sphi 0, %s56
      %s74 = sphi 0, %s74
      %s76 = sphi 0, %s74
      %s77 = sphi 0, %s76
      %s91 = sphi 0, %s77
      %s95 = sphi 0, %s95
      %s97 = sphi 0, %s95
      %s98 = sphi 0, %s97
      %s112 = sphi 0, %s98
      %s116 = sphi 0, %s116
      %s118 = sphi 0, %s116
      %s119 = sphi 0, %s118
      %s133 = sphi 0, %s119
      %s137 = sphi 0, %s137
      %s139 = sphi 0, %s137
      %s140 = sphi 0, %s139
      %s154 = sphi 0, %s140
      %s158 = sphi 0, %s158
      %s160 = sphi 0, %s158
      %s161 = sphi 0, %s160
      %s175 = sphi 0, %s161
      %s179 = sphi 0, %s179
      %s181 = sphi 0, %s179
      %s182 = sphi 0, %s181
      %s196 = sphi 0, %s182
      %s202 = sphi 0, %s204
      %s205 = sphi 0, %s202
      %s206 = sphi 0, %s205
      %s222 = sphi 0, %s206
    $region4: #{posendf_forward.1} parent=1 // loop_header_branch
      %22 = sbr.rel (%p20) target = $region8
    $region5: #{posendf_forward.1} parent=1 // loop_body
      %s24 = ssub.s32 %s19, 1
      %s25 = ssub.s32 %s19, 2
      %s26 = sadd.s32 %s19, 1
      %s27 = ssub.s32 %s19, %s26
      %p28 = scmp.eq.s32.totalorder %s27, 0
      %s30 = sadd.s32 %s29, 1
      %s31 = scalar_select %p28, %s29, %s30
      %p34 = pneg %p28
      %p35 = scmp.eq.s32.totalorder %s19, 1
      %p36 = por %p34, %p35
      %p37 = scmp.ne.s32.totalorder %s29, %s32
      %p38 = scmp.eq.s32.totalorder %s19, 0
      %p39 = por %p37, %p38
      %p40 = scmp.ne.s32.totalorder %s29, %s32
      %p41 = scmp.eq.s32.totalorder %s24, 1
      %p42 = por %p40, %p41
      %p43 = scmp.ne.s32.totalorder %s32, %s33
      %p44 = scmp.eq.s32.totalorder %s24, 0
      %p45 = por %p43, %p44
      %p46 = scmp.ne.s32.totalorder %s32, %s33
      %p47 = scmp.eq.s32.totalorder %s25, 1
      %p48 = por %p46, %p47
      %p50 = scmp.ne.s32.totalorder %s33, %s49
      %p51 = scmp.eq.s32.totalorder %s25, 0
      %p52 = por %p50, %p51
      %s54 = sadd.s32 %s53, 1
      %p57 = scmp.eq.s32.totalorder %s19, 1
      %p58 = scmp.ne.s32.totalorder %s53, %s55
      %p59 = scmp.eq.s32.totalorder %s19, 0
      %p60 = por %p58, %p59
      %p61 = scmp.ne.s32.totalorder %s53, %s55
      %p62 = scmp.eq.s32.totalorder %s24, 1
      %p63 = por %p61, %p62
      %p64 = scmp.ne.s32.totalorder %s55, %s56
      %p65 = scmp.eq.s32.totalorder %s24, 0
      %p66 = por %p64, %p65
      %p67 = scmp.ne.s32.totalorder %s55, %s56
      %p68 = scmp.eq.s32.totalorder %s25, 1
      %p69 = por %p67, %p68
      %p71 = scmp.ne.s32.totalorder %s56, %s70
      %p72 = scmp.eq.s32.totalorder %s25, 0
      %p73 = por %p71, %p72
      %s75 = sadd.s32 %s74, 1
      %p78 = scmp.eq.s32.totalorder %s19, 1
      %p79 = scmp.ne.s32.totalorder %s74, %s76
      %p80 = scmp.eq.s32.totalorder %s19, 0
      %p81 = por %p79, %p80
      %p82 = scmp.ne.s32.totalorder %s74, %s76
      %p83 = scmp.eq.s32.totalorder %s24, 1
      %p84 = por %p82, %p83
      %p85 = scmp.ne.s32.totalorder %s76, %s77
      %p86 = scmp.eq.s32.totalorder %s24, 0
      %p87 = por %p85, %p86
      %p88 = scmp.ne.s32.totalorder %s76, %s77
      %p89 = scmp.eq.s32.totalorder %s25, 1
      %p90 = por %p88, %p89
      %p92 = scmp.ne.s32.totalorder %s77, %s91
      %p93 = scmp.eq.s32.totalorder %s25, 0
      %p94 = por %p92, %p93
      %s96 = sadd.s32 %s95, 1
      %p99 = scmp.eq.s32.totalorder %s19, 1
      %p100 = scmp.ne.s32.totalorder %s95, %s97
      %p101 = scmp.eq.s32.totalorder %s19, 0
      %p102 = por %p100, %p101
      %p103 = scmp.ne.s32.totalorder %s95, %s97
      %p104 = scmp.eq.s32.totalorder %s24, 1
      %p105 = por %p103, %p104
      %p106 = scmp.ne.s32.totalorder %s97, %s98
      %p107 = scmp.eq.s32.totalorder %s24, 0
      %p108 = por %p106, %p107
      %p109 = scmp.ne.s32.totalorder %s97, %s98
      %p110 = scmp.eq.s32.totalorder %s25, 1
      %p111 = por %p109, %p110
      %p113 = scmp.ne.s32.totalorder %s98, %s112
      %p114 = scmp.eq.s32.totalorder %s25, 0
      %p115 = por %p113, %p114
      %s117 = sadd.s32 %s116, 1
      %p120 = scmp.eq.s32.totalorder %s19, 1
      %p121 = scmp.ne.s32.totalorder %s116, %s118
      %p122 = scmp.eq.s32.totalorder %s19, 0
      %p123 = por %p121, %p122
      %p124 = scmp.ne.s32.totalorder %s116, %s118
      %p125 = scmp.eq.s32.totalorder %s24, 1
      %p126 = por %p124, %p125
      %p127 = scmp.ne.s32.totalorder %s118, %s119
      %p128 = scmp.eq.s32.totalorder %s24, 0
      %p129 = por %p127, %p128
      %p130 = scmp.ne.s32.totalorder %s118, %s119
      %p131 = scmp.eq.s32.totalorder %s25, 1
      %p132 = por %p130, %p131
      %p134 = scmp.ne.s32.totalorder %s119, %s133
      %p135 = scmp.eq.s32.totalorder %s25, 0
      %p136 = por %p134, %p135
      %s138 = sadd.s32 %s137, 1
      %p141 = scmp.eq.s32.totalorder %s19, 1
      %p142 = scmp.ne.s32.totalorder %s137, %s139
      %p143 = scmp.eq.s32.totalorder %s19, 0
      %p144 = por %p142, %p143
      %p145 = scmp.ne.s32.totalorder %s137, %s139
      %p146 = scmp.eq.s32.totalorder %s24, 1
      %p147 = por %p145, %p146
      %p148 = scmp.ne.s32.totalorder %s139, %s140
      %p149 = scmp.eq.s32.totalorder %s24, 0
      %p150 = por %p148, %p149
      %p151 = scmp.ne.s32.totalorder %s139, %s140
      %p152 = scmp.eq.s32.totalorder %s25, 1
      %p153 = por %p151, %p152
      %p155 = scmp.ne.s32.totalorder %s140, %s154
      %p156 = scmp.eq.s32.totalorder %s25, 0
      %p157 = por %p155, %p156
      %s159 = sadd.s32 %s158, 1
      %p162 = scmp.eq.s32.totalorder %s19, 1
      %p163 = scmp.ne.s32.totalorder %s158, %s160
      %p164 = scmp.eq.s32.totalorder %s19, 0
      %p165 = por %p163, %p164
      %p166 = scmp.ne.s32.totalorder %s158, %s160
      %p167 = scmp.eq.s32.totalorder %s24, 1
      %p168 = por %p166, %p167
      %p169 = scmp.ne.s32.totalorder %s160, %s161
      %p170 = scmp.eq.s32.totalorder %s24, 0
      %p171 = por %p169, %p170
      %p172 = scmp.ne.s32.totalorder %s160, %s161
      %p173 = scmp.eq.s32.totalorder %s25, 1
      %p174 = por %p172, %p173
      %p176 = scmp.ne.s32.totalorder %s161, %s175
      %p177 = scmp.eq.s32.totalorder %s25, 0
      %p178 = por %p176, %p177
      %s180 = sadd.s32 %s179, 1
      %p183 = scmp.eq.s32.totalorder %s19, 1
      %p184 = scmp.ne.s32.totalorder %s179, %s181
      %p185 = scmp.eq.s32.totalorder %s19, 0
      %p186 = por %p184, %p185
      %p187 = scmp.ne.s32.totalorder %s179, %s181
      %p188 = scmp.eq.s32.totalorder %s24, 1
      %p189 = por %p187, %p188
      %p190 = scmp.ne.s32.totalorder %s181, %s182
      %p191 = scmp.eq.s32.totalorder %s24, 0
      %p192 = por %p190, %p191
      %p193 = scmp.ne.s32.totalorder %s181, %s182
      %p194 = scmp.eq.s32.totalorder %s25, 1
      %p195 = por %p193, %p194
      %p197 = scmp.ne.s32.totalorder %s182, %s196
      %p198 = scmp.eq.s32.totalorder %s25, 0
      %p199 = por %p197, %p198
      %s200 = ssub.s32 %s19, %s26
      %p201 = scmp.eq.s32.totalorder %s200, 0
      %s203 = sadd.s32 %s202, 1
      %s204 = scalar_select %p201, %s202, %s203
      %p207 = pneg %p201
      %p208 = scmp.eq.s32.totalorder %s19, 1
      %p209 = por %p207, %p208
      %p210 = scmp.ne.s32.totalorder %s202, %s205
      %p211 = scmp.eq.s32.totalorder %s19, 0
      %p212 = por %p210, %p211
      %p213 = scmp.ne.s32.totalorder %s202, %s205
      %p214 = scmp.eq.s32.totalorder %s24, 1
      %p215 = por %p213, %p214
      %p216 = scmp.ne.s32.totalorder %s205, %s206
      %p217 = scmp.eq.s32.totalorder %s24, 0
      %p218 = por %p216, %p217
      %p219 = scmp.ne.s32.totalorder %s205, %s206
      %p220 = scmp.eq.s32.totalorder %s25, 1
      %p221 = por %p219, %p220
      %p223 = scmp.ne.s32.totalorder %s206, %s222
      %p224 = scmp.eq.s32.totalorder %s25, 0
      %p225 = por %p223, %p224
      %p226 = scmp.le.s32.totalorder 1, %s19
      %p227 = scmp.lt.s32.totalorder %s19, 3
      %p228 = pnand %p226, %p227
      %p229 = pneg %p228
      // Predicated region
      $region9: #{posendf_forward.1} parent=5 // pred_check
        _
      $region10: #{posendf_forward.1} parent=5 // pred_check_branch
        %231 = sbr.rel (%p228) target = $region12
      $region11: #{posendf_forward.1} parent=5 // pred_region
        %s232 = ssub.s32 %s19, 1
        // Predicated region
        $region13: #{posendf_forward.1} parent=11 // pred_check
          %p233 = pneg %p66
        $region14: #{posendf_forward.1} parent=11 // pred_check_branch
          %235 = sbr.rel (%p233) target = $region16
        $region15: #{posendf_forward.1} parent=11 // pred_region
          _
        $region16: #{posendf_forward.1} parent=11 // pred_fallthru
          _
        // Predicated region
        $region17: #{posendf_forward.1} parent=11 // pred_check
          %p236 = pneg %p87
        $region18: #{posendf_forward.1} parent=11 // pred_check_branch
          %238 = sbr.rel (%p236) target = $region20
        $region19: #{posendf_forward.1} parent=11 // pred_region
          _
        $region20: #{posendf_forward.1} parent=11 // pred_fallthru
          _
        // Predicated region
        $region21: #{posendf_forward.1} parent=11 // pred_check
          %p239 = pneg %p108
        $region22: #{posendf_forward.1} parent=11 // pred_check_branch
          %241 = sbr.rel (%p239) target = $region24
        $region23: #{posendf_forward.1} parent=11 // pred_region
          _
        $region24: #{posendf_forward.1} parent=11 // pred_fallthru
          _
        // Predicated region
        $region25: #{posendf_forward.1} parent=11 // pred_check
          %p242 = pneg %p129
        $region26: #{posendf_forward.1} parent=11 // pred_check_branch
          %244 = sbr.rel (%p242) target = $region28
        $region27: #{posendf_forward.1} parent=11 // pred_region
          _
        $region28: #{posendf_forward.1} parent=11 // pred_fallthru
          _
        // Predicated region
        $region29: #{posendf_forward.1} parent=11 // pred_check
          %p245 = pneg %p150
        $region30: #{posendf_forward.1} parent=11 // pred_check_branch
          %247 = sbr.rel (%p245) target = $region32
        $region31: #{posendf_forward.1} parent=11 // pred_region
          _
        $region32: #{posendf_forward.1} parent=11 // pred_fallthru
          _
        // Predicated region
        $region33: #{posendf_forward.1} parent=11 // pred_check
          %p248 = pneg %p171
        $region34: #{posendf_forward.1} parent=11 // pred_check_branch
          %250 = sbr.rel (%p248) target = $region36
        $region35: #{posendf_forward.1} parent=11 // pred_region
          _
        $region36: #{posendf_forward.1} parent=11 // pred_fallthru
          _
        // Predicated region
        $region37: #{posendf_forward.1} parent=11 // pred_check
          %p251 = pneg %p192
        $region38: #{posendf_forward.1} parent=11 // pred_check_branch
          %253 = sbr.rel (%p251) target = $region40
        $region39: #{posendf_forward.1} parent=11 // pred_region
          _
        $region40: #{posendf_forward.1} parent=11 // pred_fallthru
          _
      $region12: #{posendf_forward.1} parent=5 // pred_fallthru
        _
      %p254 = scmp.lt.s32.totalorder %s19, 2
      // Predicated region
      $region41: #{posendf_forward.1} parent=5 // pred_check
        %p255 = pneg %p254
      $region42: #{posendf_forward.1} parent=5 // pred_check_branch
        %257 = sbr.rel (%p255) target = $region44
      $region43: #{posendf_forward.1} parent=5 // pred_region
        // Predicated region
        $region45: #{posendf_forward.1} parent=43 // pred_check
          %p258 = pneg %p39
        $region46: #{posendf_forward.1} parent=43 // pred_check_branch
          %260 = sbr.rel (%p258) target = $region48
        $region47: #{posendf_forward.1} parent=43 // pred_region
          %s261 = smul.u32 16, %s19
          %p262 = scmp.lt.s32.totalorder %s261, 31
          %s263 = scalar_select %p262, %s261, 31
          %s264 = smul.addr %s263, 8
          %s265 = scalar_lea.vmem %s0, %s264
          %s266 = smul.u32 16, %s19
        $region48: #{posendf_forward.1} parent=43 // pred_fallthru
          _
      $region44: #{posendf_forward.1} parent=5 // pred_fallthru
        _
      %p267 = scmp.le.s32.totalorder 1, %s19
      %p268 = scmp.lt.s32.totalorder %s19, 3
      %p269 = pnand %p267, %p268
      %p270 = pneg %p269
      // Predicated region
      $region49: #{posendf_forward.1} parent=5 // pred_check
        _
      $region50: #{posendf_forward.1} parent=5 // pred_check_branch
        %272 = sbr.rel (%p269) target = $region52
      $region51: #{posendf_forward.1} parent=5 // pred_region
        %s273 = ssub.s32 %s19, 1
        %s274 = smul.u32 16, %s24
        %p275 = scmp.lt.s32.totalorder %s274, 31
        %s276 = scalar_select %p275, %s274, 31
        %s277 = smul.addr %s276, 8
        %s278 = scalar_lea.vmem %s0, %s277
        %p279 = pneg %p45
        %p280 = pneg %p42
        %p281 = pneg %p66
        %p282 = pneg %p63
        %p283 = pneg %p87
        %p284 = pneg %p84
        %p285 = pneg %p108
        %p286 = pneg %p105
        %p287 = pneg %p129
        %p288 = pneg %p126
        %p289 = pneg %p150
        %p290 = pneg %p147
        %p291 = pneg %p171
        %p292 = pneg %p168
        %p293 = pneg %p192
        %p294 = pneg %p189
        %p295 = pneg %p218
        %p296 = pneg %p215
        %s297 = sand.u32 %s205, 1
        %s298 = scalar_lea.sflag [#allocation4], %s297
        %s299 = sand.u32 %s205, 1
        %s300 = scalar_lea.vmem [#allocation3], %s299
        %s301 = smul.u32 16, %s24
        %p302 = scmp.lt.s32.totalorder %s301, 31
        %s303 = scalar_select %p302, %s301, 31
        %s304 = smul.addr %s303, 8
        %s305 = scalar_lea.vmem %s0, %s304
        %s306 = smul.u32 16, %s24
        %v307 = vld [vmem:[%s305] sm:$0xff]
        %v308 = vld [vmem:[%s305 + $0x8] sm:$0xff]
        %v309 = vld [vmem:[%s305 + $0x10] sm:$0xff]
        %v310 = vld [vmem:[%s305 + $0x18] sm:$0xff]
        %v311 = vld [vmem:[%s305 + $0x20] sm:$0xff]
        %v312 = vld [vmem:[%s305 + $0x28] sm:$0xff]
        %v313 = vld [vmem:[%s305 + $0x30] sm:$0xff]
        %v314 = vld [vmem:[%s305 + $0x38] sm:$0xff]
        %v315 = vld [vmem:[%s305 + $0x40] sm:$0xff]
        %v316 = vld [vmem:[%s305 + $0x48] sm:$0xff]
        %v317 = vld [vmem:[%s305 + $0x50] sm:$0xff]
        %v318 = vld [vmem:[%s305 + $0x58] sm:$0xff]
        %v319 = vld [vmem:[%s305 + $0x60] sm:$0xff]
        %v320 = vld [vmem:[%s305 + $0x68] sm:$0xff]
        %v321 = vld [vmem:[%s305 + $0x70] sm:$0xff]
        %v322 = vld [vmem:[%s305 + $0x78] sm:$0xff]
        %v323 = vld [vmem:[%s1] sm:$0xff]
        %v324 = vld [vmem:[%s1 + $0x8] sm:$0xff]
        %v325 = vld [vmem:[%s1 + $0x10] sm:$0xff]
        %v326 = vld [vmem:[%s1 + $0x18] sm:$0xff]
        %v327 = vld [vmem:[%s1 + $0x20] sm:$0xff]
        %v328 = vld [vmem:[%s1 + $0x28] sm:$0xff]
        %v329 = vld [vmem:[%s1 + $0x30] sm:$0xff]
        %v330 = vld [vmem:[%s1 + $0x38] sm:$0xff]
        %v331 = vld [vmem:[%s1 + $0x40] sm:$0xff]
        %v332 = vld [vmem:[%s1 + $0x48] sm:$0xff]
        %v333 = vld [vmem:[%s1 + $0x50] sm:$0xf]
        %v334 = vmul.f32 %v307, %v307
        %v335 = vmul.f32 %v308, %v308
        %v336 = vmul.f32 %v309, %v309
        %v337 = vmul.f32 %v310, %v310
        %v338 = vmul.f32 %v311, %v311
        %v339 = vmul.f32 %v312, %v312
        %v340 = vmul.f32 %v313, %v313
        %v341 = vmul.f32 %v314, %v314
        %v342 = vmul.f32 %v315, %v315
        %v343 = vmul.f32 %v316, %v316
        %v344 = vmul.f32 %v317, %v317
        %v345 = vmul.f32 %v318, %v318
        %v346 = vmul.f32 %v319, %v319
        %v347 = vmul.f32 %v320, %v320
        %v348 = vmul.f32 %v321, %v321
        %v349 = vmul.f32 %v322, %v322
        %vm350 = vcmask 687104
        %v352 = vsel %vm350, %v334, 0
        %v355 = vsel %vm350, %v335, 0
        %v358 = vsel %vm350, %v336, 0
        %v361 = vsel %vm350, %v337, 0
        %v364 = vsel %vm350, %v338, 0
        %v367 = vsel %vm350, %v339, 0
        %v370 = vsel %vm350, %v340, 0
        %v373 = vsel %vm350, %v341, 0
        %v376 = vsel %vm350, %v342, 0
        %v379 = vsel %vm350, %v343, 0
        %v382 = vsel %vm350, %v344, 0
        %v385 = vsel %vm350, %v345, 0
        %v388 = vsel %vm350, %v346, 0
        %v391 = vsel %vm350, %v347, 0
        %v394 = vsel %vm350, %v348, 0
        %v397 = vsel %vm350, %v349, 0
        %vm399 = vcmask 1043456
        %v401 = vsel %vm399, %v333, 0
        %403 = vmatprep.subr.mxu0 0.0
        %404 = vmatpush1.msra.mxu0 0.0
        %405 = vmatprep.subr.mxu0 0.0
        %406 = vmatpush1.msra.mxu0 0.0
        %407 = vmatprep.subr.mxu0 0.0
        %408 = vmatpush1.msra.mxu0 0.0
        %409 = vmatprep.subr.mxu0 0.0
        %410 = vmatpush1.msra.mxu0 0.0
        %411 = vmatprep.subr.mxu0 0.0
        %412 = vmatpush1.msra.mxu0 0.0
        %413 = vmatprep.subr.mxu0 0.0
        %414 = vmatpush1.msra.mxu0 %v401
        %415 = vmatprep.subr.mxu0 0.0
        %416 = vmatpush1.msra.mxu0 %v332
        %417 = vmatprep.subr.mxu0 0.0
        %418 = vmatpush1.msra.mxu0 %v331
        %419 = vmatprep.subr.mxu0 0.0
        %420 = vmatpush1.msra.mxu0 %v330
        %421 = vmatprep.subr.mxu0 0.0
        %422 = vmatpush1.msra.mxu0 %v329
        %423 = vmatprep.subr.mxu0 0.0
        %424 = vmatpush1.msra.mxu0 %v328
        %425 = vmatprep.subr.mxu0 0.0
        %426 = vmatpush1.msra.mxu0 %v327
        %427 = vmatprep.subr.mxu0 0.0
        %428 = vmatpush1.msra.mxu0 %v326
        %429 = vmatprep.subr.mxu0 0.0
        %430 = vmatpush1.msra.mxu0 %v325
        %431 = vmatprep.subr.mxu0 0.0
        %432 = vmatpush1.msra.mxu0 %v324
        %433 = vmatprep.subr.mxu0 0.0
        %434 = vmatpush1.msra.mxu0 %v323
        %435 = vmatprep.subr.mxu0 0.0
        %436 = vmatpush2.msra.mxu0 0.0
        %437 = vmatprep.subr.mxu0 0.0
        %438 = vmatpush2.msra.mxu0 0.0
        %439 = vmatprep.subr.mxu0 0.0
        %440 = vmatpush2.msra.mxu0 0.0
        %441 = vmatprep.subr.mxu0 0.0
        %442 = vmatpush2.msra.mxu0 0.0
        %443 = vmatprep.subr.mxu0 0.0
        %444 = vmatpush2.msra.mxu0 0.0
        %445 = vmatprep.subr.mxu0 0.0
        %446 = vmatpush2.msra.mxu0 0.0
        %447 = vmatprep.subr.mxu0 0.0
        %448 = vmatpush2.msra.mxu0 0.0
        %449 = vmatprep.subr.mxu0 0.0
        %450 = vmatpush2.msra.mxu0 0.0
        %451 = vmatprep.subr.mxu0 0.0
        %452 = vmatpush2.msra.mxu0 0.0
        %453 = vmatprep.subr.mxu0 0.0
        %454 = vmatpush2.msra.mxu0 0.0
        %455 = vmatprep.subr.mxu0 0.0
        %456 = vmatpush2.msra.mxu0 0.0
        %457 = vmatprep.subr.mxu0 0.0
        %458 = vmatpush2.msra.mxu0 0.0
        %459 = vmatprep.subr.mxu0 0.0
        %460 = vmatpush2.msra.mxu0 0.0
        %461 = vmatprep.subr.mxu0 0.0
        %462 = vmatpush2.msra.mxu0 0.0
        %463 = vmatprep.subr.mxu0 0.0
        %464 = vmatpush2.msra.mxu0 0.0
        %465 = vmatprep.subr.mxu0 0.0
        %466 = vmatpush2.msra.mxu0 0.0
        %467 = vmatprep.mubr.f32.mxu0 0.0
        %468 = vmatmul.mubr.f32.gmra.mxu0 %v352
        %v469 = vpop.f32.mrf.mxu0
        %v470 = vadd.f32 0.0, %v469
        %v471 = vpop.f32.mrf.mxu0
        %472 = vmatprep.mubr.f32.mxu0 0.0
        %473 = vmatmul.mubr.f32.gmra.mxu0 %v355
        %v474 = vpop.f32.mrf.mxu0
        %v475 = vadd.f32 0.0, %v474
        %v476 = vpop.f32.mrf.mxu0
        %477 = vmatprep.mubr.f32.mxu0 0.0
        %478 = vmatmul.mubr.f32.gmra.mxu0 %v358
        %v479 = vpop.f32.mrf.mxu0
        %v480 = vadd.f32 0.0, %v479
        %v481 = vpop.f32.mrf.mxu0
        %482 = vmatprep.mubr.f32.mxu0 0.0
        %483 = vmatmul.mubr.f32.gmra.mxu0 %v361
        %v484 = vpop.f32.mrf.mxu0
        %v485 = vadd.f32 0.0, %v484
        %v486 = vpop.f32.mrf.mxu0
        %487 = vmatprep.mubr.f32.mxu0 0.0
        %488 = vmatmul.mubr.f32.gmra.mxu0 %v364
        %v489 = vpop.f32.mrf.mxu0
        %v490 = vadd.f32 0.0, %v489
        %v491 = vpop.f32.mrf.mxu0
        %492 = vmatprep.mubr.f32.mxu0 0.0
        %493 = vmatmul.mubr.f32.gmra.mxu0 %v367
        %v494 = vpop.f32.mrf.mxu0
        %v495 = vadd.f32 0.0, %v494
        %v496 = vpop.f32.mrf.mxu0
        %497 = vmatprep.mubr.f32.mxu0 0.0
        %498 = vmatmul.mubr.f32.gmra.mxu0 %v370
        %v499 = vpop.f32.mrf.mxu0
        %v500 = vadd.f32 0.0, %v499
        %v501 = vpop.f32.mrf.mxu0
        %502 = vmatprep.mubr.f32.mxu0 0.0
        %503 = vmatmul.mubr.f32.gmra.mxu0 %v373
        %v504 = vpop.f32.mrf.mxu0
        %v505 = vadd.f32 0.0, %v504
        %v506 = vpop.f32.mrf.mxu0
        %507 = vmatprep.mubr.f32.mxu0 0.0
        %508 = vmatmul.mubr.f32.gmra.mxu0 %v376
        %v509 = vpop.f32.mrf.mxu0
        %v510 = vadd.f32 0.0, %v509
        %v511 = vpop.f32.mrf.mxu0
        %512 = vmatprep.mubr.f32.mxu0 0.0
        %513 = vmatmul.mubr.f32.gmra.mxu0 %v379
        %v514 = vpop.f32.mrf.mxu0
        %v515 = vadd.f32 0.0, %v514
        %v516 = vpop.f32.mrf.mxu0
        %517 = vmatprep.mubr.f32.mxu0 0.0
        %518 = vmatmul.mubr.f32.gmra.mxu0 %v382
        %v519 = vpop.f32.mrf.mxu0
        %v520 = vadd.f32 0.0, %v519
        %v521 = vpop.f32.mrf.mxu0
        %522 = vmatprep.mubr.f32.mxu0 0.0
        %523 = vmatmul.mubr.f32.gmra.mxu0 %v385
        %v524 = vpop.f32.mrf.mxu0
        %v525 = vadd.f32 0.0, %v524
        %v526 = vpop.f32.mrf.mxu0
        %527 = vmatprep.mubr.f32.mxu0 0.0
        %528 = vmatmul.mubr.f32.gmra.mxu0 %v388
        %v529 = vpop.f32.mrf.mxu0
        %v530 = vadd.f32 0.0, %v529
        %v531 = vpop.f32.mrf.mxu0
        %532 = vmatprep.mubr.f32.mxu0 0.0
        %533 = vmatmul.mubr.f32.gmra.mxu0 %v391
        %v534 = vpop.f32.mrf.mxu0
        %v535 = vadd.f32 0.0, %v534
        %v536 = vpop.f32.mrf.mxu0
        %537 = vmatprep.mubr.f32.mxu0 0.0
        %538 = vmatmul.mubr.f32.gmra.mxu0 %v394
        %v539 = vpop.f32.mrf.mxu0
        %v540 = vadd.f32 0.0, %v539
        %v541 = vpop.f32.mrf.mxu0
        %542 = vmatprep.mubr.f32.mxu0 0.0
        %543 = vmatmul.mubr.f32.gmra.mxu0 %v397
        %v544 = vpop.f32.mrf.mxu0
        %v545 = vadd.f32 0.0, %v544
        %v546 = vpop.f32.mrf.mxu0
        %547 = vdwg.mxu0
        %v548 = vrsqrt.pop %v470
        %v549 = vmul.f32 %v470, %v548
        %vm550 = vcmp.eq.f32.partialorder %v470, inf
        %v551 = vsel %vm550, %v470, %v549
        %vm552 = vcmp.eq.f32.partialorder %v470, 0.0
        %v553 = vand.u32 %v470, 2147483648
        %v554 = vsel %vm552, %v553, %v551
        %v555 = vrsqrt.pop %v475
        %v556 = vmul.f32 %v475, %v555
        %vm557 = vcmp.eq.f32.partialorder %v475, inf
        %v558 = vsel %vm557, %v475, %v556
        %vm559 = vcmp.eq.f32.partialorder %v475, 0.0
        %v560 = vand.u32 %v475, 2147483648
        %v561 = vsel %vm559, %v560, %v558
        %v562 = vrsqrt.pop %v480
        %v563 = vmul.f32 %v480, %v562
        %vm564 = vcmp.eq.f32.partialorder %v480, inf
        %v565 = vsel %vm564, %v480, %v563
        %vm566 = vcmp.eq.f32.partialorder %v480, 0.0
        %v567 = vand.u32 %v480, 2147483648
        %v568 = vsel %vm566, %v567, %v565
        %v569 = vrsqrt.pop %v485
        %v570 = vmul.f32 %v485, %v569
        %vm571 = vcmp.eq.f32.partialorder %v485, inf
        %v572 = vsel %vm571, %v485, %v570
        %vm573 = vcmp.eq.f32.partialorder %v485, 0.0
        %v574 = vand.u32 %v485, 2147483648
        %v575 = vsel %vm573, %v574, %v572
        %v576 = vrsqrt.pop %v490
        %v577 = vmul.f32 %v490, %v576
        %vm578 = vcmp.eq.f32.partialorder %v490, inf
        %v579 = vsel %vm578, %v490, %v577
        %vm580 = vcmp.eq.f32.partialorder %v490, 0.0
        %v581 = vand.u32 %v490, 2147483648
        %v582 = vsel %vm580, %v581, %v579
        %v583 = vrsqrt.pop %v495
        %v584 = vmul.f32 %v495, %v583
        %vm585 = vcmp.eq.f32.partialorder %v495, inf
        %v586 = vsel %vm585, %v495, %v584
        %vm587 = vcmp.eq.f32.partialorder %v495, 0.0
        %v588 = vand.u32 %v495, 2147483648
        %v589 = vsel %vm587, %v588, %v586
        %v590 = vrsqrt.pop %v500
        %v591 = vmul.f32 %v500, %v590
        %vm592 = vcmp.eq.f32.partialorder %v500, inf
        %v593 = vsel %vm592, %v500, %v591
        %vm594 = vcmp.eq.f32.partialorder %v500, 0.0
        %v595 = vand.u32 %v500, 2147483648
        %v596 = vsel %vm594, %v595, %v593
        %v597 = vrsqrt.pop %v505
        %v598 = vmul.f32 %v505, %v597
        %vm599 = vcmp.eq.f32.partialorder %v505, inf
        %v600 = vsel %vm599, %v505, %v598
        %vm601 = vcmp.eq.f32.partialorder %v505, 0.0
        %v602 = vand.u32 %v505, 2147483648
        %v603 = vsel %vm601, %v602, %v600
        %v604 = vrsqrt.pop %v510
        %v605 = vmul.f32 %v510, %v604
        %vm606 = vcmp.eq.f32.partialorder %v510, inf
        %v607 = vsel %vm606, %v510, %v605
        %vm608 = vcmp.eq.f32.partialorder %v510, 0.0
        %v609 = vand.u32 %v510, 2147483648
        %v610 = vsel %vm608, %v609, %v607
        %v611 = vrsqrt.pop %v515
        %v612 = vmul.f32 %v515, %v611
        %vm613 = vcmp.eq.f32.partialorder %v515, inf
        %v614 = vsel %vm613, %v515, %v612
        %vm615 = vcmp.eq.f32.partialorder %v515, 0.0
        %v616 = vand.u32 %v515, 2147483648
        %v617 = vsel %vm615, %v616, %v614
        %v618 = vrsqrt.pop %v520
        %v619 = vmul.f32 %v520, %v618
        %vm620 = vcmp.eq.f32.partialorder %v520, inf
        %v621 = vsel %vm620, %v520, %v619
        %vm622 = vcmp.eq.f32.partialorder %v520, 0.0
        %v623 = vand.u32 %v520, 2147483648
        %v624 = vsel %vm622, %v623, %v621
        %v625 = vrsqrt.pop %v525
        %v626 = vmul.f32 %v525, %v625
        %vm627 = vcmp.eq.f32.partialorder %v525, inf
        %v628 = vsel %vm627, %v525, %v626
        %vm629 = vcmp.eq.f32.partialorder %v525, 0.0
        %v630 = vand.u32 %v525, 2147483648
        %v631 = vsel %vm629, %v630, %v628
        %v632 = vrsqrt.pop %v530
        %v633 = vmul.f32 %v530, %v632
        %vm634 = vcmp.eq.f32.partialorder %v530, inf
        %v635 = vsel %vm634, %v530, %v633
        %vm636 = vcmp.eq.f32.partialorder %v530, 0.0
        %v637 = vand.u32 %v530, 2147483648
        %v638 = vsel %vm636, %v637, %v635
        %v639 = vrsqrt.pop %v535
        %v640 = vmul.f32 %v535, %v639
        %vm641 = vcmp.eq.f32.partialorder %v535, inf
        %v642 = vsel %vm641, %v535, %v640
        %vm643 = vcmp.eq.f32.partialorder %v535, 0.0
        %v644 = vand.u32 %v535, 2147483648
        %v645 = vsel %vm643, %v644, %v642
        %v646 = vrsqrt.pop %v540
        %v647 = vmul.f32 %v540, %v646
        %vm648 = vcmp.eq.f32.partialorder %v540, inf
        %v649 = vsel %vm648, %v540, %v647
        %vm650 = vcmp.eq.f32.partialorder %v540, 0.0
        %v651 = vand.u32 %v540, 2147483648
        %v652 = vsel %vm650, %v651, %v649
        %v653 = vrsqrt.pop %v545
        %v654 = vmul.f32 %v545, %v653
        %vm655 = vcmp.eq.f32.partialorder %v545, inf
        %v656 = vsel %vm655, %v545, %v654
        %vm657 = vcmp.eq.f32.partialorder %v545, 0.0
        %v658 = vand.u32 %v545, 2147483648
        %v659 = vsel %vm657, %v658, %v656
        %v660 = vmax.f32 %v554, 1e-12
        %v661 = vmax.f32 %v561, 1e-12
        %v662 = vmax.f32 %v568, 1e-12
        %v663 = vmax.f32 %v575, 1e-12
        %v664 = vmax.f32 %v582, 1e-12
        %v665 = vmax.f32 %v589, 1e-12
        %v666 = vmax.f32 %v596, 1e-12
        %v667 = vmax.f32 %v603, 1e-12
        %v668 = vmax.f32 %v610, 1e-12
        %v669 = vmax.f32 %v617, 1e-12
        %v670 = vmax.f32 %v624, 1e-12
        %v671 = vmax.f32 %v631, 1e-12
        %v672 = vmax.f32 %v638, 1e-12
        %v673 = vmax.f32 %v645, 1e-12
        %v674 = vmax.f32 %v652, 1e-12
        %v675 = vmax.f32 %v659, 1e-12
        %vm676 = vcmask 31744
        %v678 = vsel %vm676, %v660, 0
        %v681 = vsel %vm676, %v661, 0
        %v684 = vsel %vm676, %v662, 0
        %v687 = vsel %vm676, %v663, 0
        %v690 = vsel %vm676, %v664, 0
        %v693 = vsel %vm676, %v665, 0
        %v696 = vsel %vm676, %v666, 0
        %v699 = vsel %vm676, %v667, 0
        %v702 = vsel %vm676, %v668, 0
        %v705 = vsel %vm676, %v669, 0
        %v708 = vsel %vm676, %v670, 0
        %v711 = vsel %vm676, %v671, 0
        %v714 = vsel %vm676, %v672, 0
        %v717 = vsel %vm676, %v673, 0
        %v720 = vsel %vm676, %v674, 0
        %v723 = vsel %vm676, %v675, 0
        %v726 = vsel %vm676, %v323, 0
        %v729 = vsel %vm676, %v324, 0
        %v732 = vsel %vm676, %v325, 0
        %v735 = vsel %vm676, %v326, 0
        %v738 = vsel %vm676, %v327, 0
        %v741 = vsel %vm676, %v328, 0
        %v744 = vsel %vm676, %v329, 0
        %v747 = vsel %vm676, %v330, 0
        %v750 = vsel %vm676, %v331, 0
        %v753 = vsel %vm676, %v332, 0
        %v755 = vsel %vm676, %v333, 0
        %757 = vmatprep.subr.mxu0 0.0
        %758 = vmatpush1.xpose.msra.mxu0 0.0
        %759 = vmatprep.subr.mxu0 0.0
        %760 = vmatpush1.xpose.msra.mxu0 0.0
        %761 = vmatprep.subr.mxu0 0.0
        %762 = vmatpush1.xpose.msra.mxu0 0.0
        %763 = vmatprep.subr.mxu0 0.0
        %764 = vmatpush1.xpose.msra.mxu0 0.0
        %765 = vmatprep.subr.mxu0 0.0
        %766 = vmatpush1.xpose.msra.mxu0 0.0
        %767 = vmatprep.subr.mxu0 0.0
        %768 = vmatpush1.xpose.msra.mxu0 %v755
        %769 = vmatprep.subr.mxu0 0.0
        %770 = vmatpush1.xpose.msra.mxu0 %v753
        %771 = vmatprep.subr.mxu0 0.0
        %772 = vmatpush1.xpose.msra.mxu0 %v750
        %773 = vmatprep.subr.mxu0 0.0
        %774 = vmatpush1.xpose.msra.mxu0 %v747
        %775 = vmatprep.subr.mxu0 0.0
        %776 = vmatpush1.xpose.msra.mxu0 %v744
        %777 = vmatprep.subr.mxu0 0.0
        %778 = vmatpush1.xpose.msra.mxu0 %v741
        %779 = vmatprep.subr.mxu0 0.0
        %780 = vmatpush1.xpose.msra.mxu0 %v738
        %781 = vmatprep.subr.mxu0 0.0
        %782 = vmatpush1.xpose.msra.mxu0 %v735
        %783 = vmatprep.subr.mxu0 0.0
        %784 = vmatpush1.xpose.msra.mxu0 %v732
        %785 = vmatprep.subr.mxu0 0.0
        %786 = vmatpush1.xpose.msra.mxu0 %v729
        %787 = vmatprep.subr.mxu0 0.0
        %788 = vmatpush1.xpose.msra.mxu0 %v726
        %789 = vmatprep.subr.mxu0 0.0
        %790 = vmatpush2.xpose.msra.mxu0 0.0
        %791 = vmatprep.subr.mxu0 0.0
        %792 = vmatpush2.xpose.msra.mxu0 0.0
        %793 = vmatprep.subr.mxu0 0.0
        %794 = vmatpush2.xpose.msra.mxu0 0.0
        %795 = vmatprep.subr.mxu0 0.0
        %796 = vmatpush2.xpose.msra.mxu0 0.0
        %797 = vmatprep.subr.mxu0 0.0
        %798 = vmatpush2.xpose.msra.mxu0 0.0
        %799 = vmatprep.subr.mxu0 0.0
        %800 = vmatpush2.xpose.msra.mxu0 0.0
        %801 = vmatprep.subr.mxu0 0.0
        %802 = vmatpush2.xpose.msra.mxu0 0.0
        %803 = vmatprep.subr.mxu0 0.0
        %804 = vmatpush2.xpose.msra.mxu0 0.0
        %805 = vmatprep.subr.mxu0 0.0
        %806 = vmatpush2.xpose.msra.mxu0 0.0
        %807 = vmatprep.subr.mxu0 0.0
        %808 = vmatpush2.xpose.msra.mxu0 0.0
        %809 = vmatprep.subr.mxu0 0.0
        %810 = vmatpush2.xpose.msra.mxu0 0.0
        %811 = vmatprep.subr.mxu0 0.0
        %812 = vmatpush2.xpose.msra.mxu0 0.0
        %813 = vmatprep.subr.mxu0 0.0
        %814 = vmatpush2.xpose.msra.mxu0 0.0
        %815 = vmatprep.subr.mxu0 0.0
        %816 = vmatpush2.xpose.msra.mxu0 0.0
        %817 = vmatprep.subr.mxu0 0.0
        %818 = vmatpush2.xpose.msra.mxu0 0.0
        %819 = vmatprep.subr.mxu0 0.0
        %820 = vmatpush2.xpose.msra.mxu0 0.0
        %821 = vmatprep.mubr.f32.mxu0 0.0
        %822 = vmatmul.mubr.f32.gmra.mxu0 %v678
        %v823 = vpop.f32.mrf.mxu0
        %v824 = vadd.f32 0.0, %v823
        %v825 = vpop.f32.mrf.mxu0
        %826 = vmatprep.mubr.f32.mxu0 0.0
        %827 = vmatmul.mubr.f32.gmra.mxu0 %v681
        %v828 = vpop.f32.mrf.mxu0
        %v829 = vadd.f32 0.0, %v828
        %v830 = vpop.f32.mrf.mxu0
        %831 = vmatprep.mubr.f32.mxu0 0.0
        %832 = vmatmul.mubr.f32.gmra.mxu0 %v684
        %v833 = vpop.f32.mrf.mxu0
        %v834 = vadd.f32 0.0, %v833
        %v835 = vpop.f32.mrf.mxu0
        %836 = vmatprep.mubr.f32.mxu0 0.0
        %837 = vmatmul.mubr.f32.gmra.mxu0 %v687
        %v838 = vpop.f32.mrf.mxu0
        %v839 = vadd.f32 0.0, %v838
        %v840 = vpop.f32.mrf.mxu0
        %841 = vmatprep.mubr.f32.mxu0 0.0
        %842 = vmatmul.mubr.f32.gmra.mxu0 %v690
        %v843 = vpop.f32.mrf.mxu0
        %v844 = vadd.f32 0.0, %v843
        %v845 = vpop.f32.mrf.mxu0
        %846 = vmatprep.mubr.f32.mxu0 0.0
        %847 = vmatmul.mubr.f32.gmra.mxu0 %v693
        %v848 = vpop.f32.mrf.mxu0
        %v849 = vadd.f32 0.0, %v848
        %v850 = vpop.f32.mrf.mxu0
        %851 = vmatprep.mubr.f32.mxu0 0.0
        %852 = vmatmul.mubr.f32.gmra.mxu0 %v696
        %v853 = vpop.f32.mrf.mxu0
        %v854 = vadd.f32 0.0, %v853
        %v855 = vpop.f32.mrf.mxu0
        %856 = vmatprep.mubr.f32.mxu0 0.0
        %857 = vmatmul.mubr.f32.gmra.mxu0 %v699
        %v858 = vpop.f32.mrf.mxu0
        %v859 = vadd.f32 0.0, %v858
        %v860 = vpop.f32.mrf.mxu0
        %861 = vmatprep.mubr.f32.mxu0 0.0
        %862 = vmatmul.mubr.f32.gmra.mxu0 %v702
        %v863 = vpop.f32.mrf.mxu0
        %v864 = vadd.f32 0.0, %v863
        %v865 = vpop.f32.mrf.mxu0
        %866 = vmatprep.mubr.f32.mxu0 0.0
        %867 = vmatmul.mubr.f32.gmra.mxu0 %v705
        %v868 = vpop.f32.mrf.mxu0
        %v869 = vadd.f32 0.0, %v868
        %v870 = vpop.f32.mrf.mxu0
        %871 = vmatprep.mubr.f32.mxu0 0.0
        %872 = vmatmul.mubr.f32.gmra.mxu0 %v708
        %v873 = vpop.f32.mrf.mxu0
        %v874 = vadd.f32 0.0, %v873
        %v875 = vpop.f32.mrf.mxu0
        %876 = vmatprep.mubr.f32.mxu0 0.0
        %877 = vmatmul.mubr.f32.gmra.mxu0 %v711
        %v878 = vpop.f32.mrf.mxu0
        %v879 = vadd.f32 0.0, %v878
        %v880 = vpop.f32.mrf.mxu0
        %881 = vmatprep.mubr.f32.mxu0 0.0
        %882 = vmatmul.mubr.f32.gmra.mxu0 %v714
        %v883 = vpop.f32.mrf.mxu0
        %v884 = vadd.f32 0.0, %v883
        %v885 = vpop.f32.mrf.mxu0
        %886 = vmatprep.mubr.f32.mxu0 0.0
        %887 = vmatmul.mubr.f32.gmra.mxu0 %v717
        %v888 = vpop.f32.mrf.mxu0
        %v889 = vadd.f32 0.0, %v888
        %v890 = vpop.f32.mrf.mxu0
        %891 = vmatprep.mubr.f32.mxu0 0.0
        %892 = vmatmul.mubr.f32.gmra.mxu0 %v720
        %v893 = vpop.f32.mrf.mxu0
        %v894 = vadd.f32 0.0, %v893
        %v895 = vpop.f32.mrf.mxu0
        %896 = vmatprep.mubr.f32.mxu0 0.0
        %897 = vmatmul.mubr.f32.gmra.mxu0 %v723
        %v898 = vpop.f32.mrf.mxu0
        %v899 = vadd.f32 0.0, %v898
        %v900 = vpop.f32.mrf.mxu0
        %901 = vdwg.mxu0
        %v902 = vrcp.pop %v824
        %v903 = vmul.f32 %v307, %v902
        %v904 = vrcp.pop %v829
        %v905 = vmul.f32 %v308, %v904
        %v906 = vrcp.pop %v834
        %v907 = vmul.f32 %v309, %v906
        %v908 = vrcp.pop %v839
        %v909 = vmul.f32 %v310, %v908
        %v910 = vrcp.pop %v844
        %v911 = vmul.f32 %v311, %v910
        %v912 = vrcp.pop %v849
        %v913 = vmul.f32 %v312, %v912
        %v914 = vrcp.pop %v854
        %v915 = vmul.f32 %v313, %v914
        %v916 = vrcp.pop %v859
        %v917 = vmul.f32 %v314, %v916
        %v918 = vrcp.pop %v864
        %v919 = vmul.f32 %v315, %v918
        %v920 = vrcp.pop %v869
        %v921 = vmul.f32 %v316, %v920
        %v922 = vrcp.pop %v874
        %v923 = vmul.f32 %v317, %v922
        %v924 = vrcp.pop %v879
        %v925 = vmul.f32 %v318, %v924
        %v926 = vrcp.pop %v884
        %v927 = vmul.f32 %v319, %v926
        %v928 = vrcp.pop %v889
        %v929 = vmul.f32 %v320, %v928
        %v930 = vrcp.pop %v894
        %v931 = vmul.f32 %v321, %v930
        %v932 = vrcp.pop %v899
        %v933 = vmul.f32 %v322, %v932
        %v934 = vld [vmem:[%s2] sm:$0xff]
        %v935 = vld [vmem:[%s2 + $0x8] sm:$0xff]
        %v936 = vld [vmem:[%s2 + $0x10] sm:$0xff]
        %v937 = vld [vmem:[%s2 + $0x18] sm:$0xff]
        %v938 = vld [vmem:[%s2 + $0x20] sm:$0xff]
        %v939 = vld [vmem:[%s2 + $0x28] sm:$0xff]
        %v940 = vld [vmem:[%s2 + $0x30] sm:$0xff]
        %v941 = vld [vmem:[%s2 + $0x38] sm:$0xff]
        %v942 = vld [vmem:[%s2 + $0x40] sm:$0xff]
        %v943 = vld [vmem:[%s2 + $0x48] sm:$0xff]
        %v944 = vld [vmem:[%s2 + $0x50] sm:$0xf]
        %v945 = vld [vmem:[%s3] sm:$0x1]
        %v947 = vlaneseq
        %v948 = vshrl.u32 %v947, 7
        %v949 = vsub.s32 0, %v948
        %v950 = vrot.slane %v945, %v949
        %v953 = vsel %vm350, %v903, 0
        %v956 = vsel %vm350, %v905, 0
        %v959 = vsel %vm350, %v907, 0
        %v962 = vsel %vm350, %v909, 0
        %v965 = vsel %vm350, %v911, 0
        %v968 = vsel %vm350, %v913, 0
        %v971 = vsel %vm350, %v915, 0
        %v974 = vsel %vm350, %v917, 0
        %v977 = vsel %vm350, %v919, 0
        %v980 = vsel %vm350, %v921, 0
        %v983 = vsel %vm350, %v923, 0
        %v986 = vsel %vm350, %v925, 0
        %v989 = vsel %vm350, %v927, 0
        %v992 = vsel %vm350, %v929, 0
        %v995 = vsel %vm350, %v931, 0
        %v998 = vsel %vm350, %v933, 0
        %v1001 = vsel %vm399, %v944, 0
        %1003 = vmatprep.subr.mxu0 0.0
        %1004 = vmatpush1.msra.mxu0 0.0
        %1005 = vmatprep.subr.mxu0 0.0
        %1006 = vmatpush1.msra.mxu0 0.0
        %1007 = vmatprep.subr.mxu0 0.0
        %1008 = vmatpush1.msra.mxu0 0.0
        %1009 = vmatprep.subr.mxu0 0.0
        %1010 = vmatpush1.msra.mxu0 0.0
        %1011 = vmatprep.subr.mxu0 0.0
        %1012 = vmatpush1.msra.mxu0 0.0
        %1013 = vmatprep.subr.mxu0 0.0
        %1014 = vmatpush1.msra.mxu0 %v1001
        %1015 = vmatprep.subr.mxu0 0.0
        %1016 = vmatpush1.msra.mxu0 %v943
        %1017 = vmatprep.subr.mxu0 0.0
        %1018 = vmatpush1.msra.mxu0 %v942
        %1019 = vmatprep.subr.mxu0 0.0
        %1020 = vmatpush1.msra.mxu0 %v941
        %1021 = vmatprep.subr.mxu0 0.0
        %1022 = vmatpush1.msra.mxu0 %v940
        %1023 = vmatprep.subr.mxu0 0.0
        %1024 = vmatpush1.msra.mxu0 %v939
        %1025 = vmatprep.subr.mxu0 0.0
        %1026 = vmatpush1.msra.mxu0 %v938
        %1027 = vmatprep.subr.mxu0 0.0
        %1028 = vmatpush1.msra.mxu0 %v937
        %1029 = vmatprep.subr.mxu0 0.0
        %1030 = vmatpush1.msra.mxu0 %v936
        %1031 = vmatprep.subr.mxu0 0.0
        %1032 = vmatpush1.msra.mxu0 %v935
        %1033 = vmatprep.subr.mxu0 0.0
        %1034 = vmatpush1.msra.mxu0 %v934
        %1035 = vmatprep.subr.mxu0 0.0
        %1036 = vmatpush2.msra.mxu0 0.0
        %1037 = vmatprep.subr.mxu0 0.0
        %1038 = vmatpush2.msra.mxu0 0.0
        %1039 = vmatprep.subr.mxu0 0.0
        %1040 = vmatpush2.msra.mxu0 0.0
        %1041 = vmatprep.subr.mxu0 0.0
        %1042 = vmatpush2.msra.mxu0 0.0
        %1043 = vmatprep.subr.mxu0 0.0
        %1044 = vmatpush2.msra.mxu0 0.0
        %1045 = vmatprep.subr.mxu0 0.0
        %1046 = vmatpush2.msra.mxu0 0.0
        %1047 = vmatprep.subr.mxu0 0.0
        %1048 = vmatpush2.msra.mxu0 0.0
        %1049 = vmatprep.subr.mxu0 0.0
        %1050 = vmatpush2.msra.mxu0 0.0
        %1051 = vmatprep.subr.mxu0 0.0
        %1052 = vmatpush2.msra.mxu0 0.0
        %1053 = vmatprep.subr.mxu0 0.0
        %1054 = vmatpush2.msra.mxu0 0.0
        %1055 = vmatprep.subr.mxu0 0.0
        %1056 = vmatpush2.msra.mxu0 0.0
        %1057 = vmatprep.subr.mxu0 0.0
        %1058 = vmatpush2.msra.mxu0 0.0
        %1059 = vmatprep.subr.mxu0 0.0
        %1060 = vmatpush2.msra.mxu0 0.0
        %1061 = vmatprep.subr.mxu0 0.0
        %1062 = vmatpush2.msra.mxu0 0.0
        %1063 = vmatprep.subr.mxu0 0.0
        %1064 = vmatpush2.msra.mxu0 0.0
        %1065 = vmatprep.subr.mxu0 0.0
        %1066 = vmatpush2.msra.mxu0 0.0
        %1067 = vmatprep.mubr.f32.mxu0 0.0
        %1068 = vmatmul.mubr.f32.gmra.mxu0 %v953
        %v1069 = vpop.f32.mrf.mxu0
        %v1070 = vadd.f32 %v950, %v1069
        %v1071 = vpop.f32.mrf.mxu0
        %1072 = vmatprep.mubr.f32.mxu0 0.0
        %1073 = vmatmul.mubr.f32.gmra.mxu0 %v956
        %v1074 = vpop.f32.mrf.mxu0
        %v1075 = vadd.f32 %v950, %v1074
        %v1076 = vpop.f32.mrf.mxu0
        %1077 = vmatprep.mubr.f32.mxu0 0.0
        %1078 = vmatmul.mubr.f32.gmra.mxu0 %v959
        %v1079 = vpop.f32.mrf.mxu0
        %v1080 = vadd.f32 %v950, %v1079
        %v1081 = vpop.f32.mrf.mxu0
        %1082 = vmatprep.mubr.f32.mxu0 0.0
        %1083 = vmatmul.mubr.f32.gmra.mxu0 %v962
        %v1084 = vpop.f32.mrf.mxu0
        %v1085 = vadd.f32 %v950, %v1084
        %v1086 = vpop.f32.mrf.mxu0
        %1087 = vmatprep.mubr.f32.mxu0 0.0
        %1088 = vmatmul.mubr.f32.gmra.mxu0 %v965
        %v1089 = vpop.f32.mrf.mxu0
        %v1090 = vadd.f32 %v950, %v1089
        %v1091 = vpop.f32.mrf.mxu0
        %1092 = vmatprep.mubr.f32.mxu0 0.0
        %1093 = vmatmul.mubr.f32.gmra.mxu0 %v968
        %v1094 = vpop.f32.mrf.mxu0
        %v1095 = vadd.f32 %v950, %v1094
        %v1096 = vpop.f32.mrf.mxu0
        %1097 = vmatprep.mubr.f32.mxu0 0.0
        %1098 = vmatmul.mubr.f32.gmra.mxu0 %v971
        %v1099 = vpop.f32.mrf.mxu0
        %v1100 = vadd.f32 %v950, %v1099
        %v1101 = vpop.f32.mrf.mxu0
        %1102 = vmatprep.mubr.f32.mxu0 0.0
        %1103 = vmatmul.mubr.f32.gmra.mxu0 %v974
        %v1104 = vpop.f32.mrf.mxu0
        %v1105 = vadd.f32 %v950, %v1104
        %v1106 = vpop.f32.mrf.mxu0
        %1107 = vmatprep.mubr.f32.mxu0 0.0
        %1108 = vmatmul.mubr.f32.gmra.mxu0 %v977
        %v1109 = vpop.f32.mrf.mxu0
        %v1110 = vadd.f32 %v950, %v1109
        %v1111 = vpop.f32.mrf.mxu0
        %1112 = vmatprep.mubr.f32.mxu0 0.0
        %1113 = vmatmul.mubr.f32.gmra.mxu0 %v980
        %v1114 = vpop.f32.mrf.mxu0
        %v1115 = vadd.f32 %v950, %v1114
        %v1116 = vpop.f32.mrf.mxu0
        %1117 = vmatprep.mubr.f32.mxu0 0.0
        %1118 = vmatmul.mubr.f32.gmra.mxu0 %v983
        %v1119 = vpop.f32.mrf.mxu0
        %v1120 = vadd.f32 %v950, %v1119
        %v1121 = vpop.f32.mrf.mxu0
        %1122 = vmatprep.mubr.f32.mxu0 0.0
        %1123 = vmatmul.mubr.f32.gmra.mxu0 %v986
        %v1124 = vpop.f32.mrf.mxu0
        %v1125 = vadd.f32 %v950, %v1124
        %v1126 = vpop.f32.mrf.mxu0
        %1127 = vmatprep.mubr.f32.mxu0 0.0
        %1128 = vmatmul.mubr.f32.gmra.mxu0 %v989
        %v1129 = vpop.f32.mrf.mxu0
        %v1130 = vadd.f32 %v950, %v1129
        %v1131 = vpop.f32.mrf.mxu0
        %1132 = vmatprep.mubr.f32.mxu0 0.0
        %1133 = vmatmul.mubr.f32.gmra.mxu0 %v992
        %v1134 = vpop.f32.mrf.mxu0
        %v1135 = vadd.f32 %v950, %v1134
        %v1136 = vpop.f32.mrf.mxu0
        %1137 = vmatprep.mubr.f32.mxu0 0.0
        %1138 = vmatmul.mubr.f32.gmra.mxu0 %v995
        %v1139 = vpop.f32.mrf.mxu0
        %v1140 = vadd.f32 %v950, %v1139
        %v1141 = vpop.f32.mrf.mxu0
        %1142 = vmatprep.mubr.f32.mxu0 0.0
        %1143 = vmatmul.mubr.f32.gmra.mxu0 %v998
        %v1144 = vpop.f32.mrf.mxu0
        %v1145 = vadd.f32 %v950, %v1144
        %v1146 = vpop.f32.mrf.mxu0
        %1147 = vdwg.mxu0
        %v1148 = vmax.f32 %v1070, 0.0
        %v1149 = vmax.f32 %v1075, 0.0
        %v1150 = vmax.f32 %v1080, 0.0
        %v1151 = vmax.f32 %v1085, 0.0
        %v1152 = vmax.f32 %v1090, 0.0
        %v1153 = vmax.f32 %v1095, 0.0
        %v1154 = vmax.f32 %v1100, 0.0
        %v1155 = vmax.f32 %v1105, 0.0
        %v1156 = vmax.f32 %v1110, 0.0
        %v1157 = vmax.f32 %v1115, 0.0
        %v1158 = vmax.f32 %v1120, 0.0
        %v1159 = vmax.f32 %v1125, 0.0
        %v1160 = vmax.f32 %v1130, 0.0
        %v1161 = vmax.f32 %v1135, 0.0
        %v1162 = vmax.f32 %v1140, 0.0
        %v1163 = vmax.f32 %v1145, 0.0
        %v1164 = vld [vmem:[%s4] sm:$0xff]
        %v1165 = vld [vmem:[%s4 + $0x8] sm:$0xff]
        %v1166 = vld [vmem:[%s4 + $0x10] sm:$0xff]
        %v1167 = vld [vmem:[%s4 + $0x18] sm:$0xff]
        %v1168 = vld [vmem:[%s4 + $0x20] sm:$0xff]
        %v1169 = vld [vmem:[%s4 + $0x28] sm:$0xff]
        %v1170 = vld [vmem:[%s4 + $0x30] sm:$0xff]
        %v1171 = vld [vmem:[%s4 + $0x38] sm:$0xff]
        %v1172 = vld [vmem:[%s5] sm:$0x1]
        %v1174 = vlaneseq
        %v1175 = vshrl.u32 %v1174, 7
        %v1176 = vsub.s32 0, %v1175
        %v1177 = vrot.slane %v1172, %v1176
        %vm1179 = vcmask 523264
        %v1181 = vsel %vm1179, %v1148, 0
        %v1184 = vsel %vm1179, %v1149, 0
        %v1187 = vsel %vm1179, %v1150, 0
        %v1190 = vsel %vm1179, %v1151, 0
        %v1193 = vsel %vm1179, %v1152, 0
        %v1196 = vsel %vm1179, %v1153, 0
        %v1199 = vsel %vm1179, %v1154, 0
        %v1202 = vsel %vm1179, %v1155, 0
        %v1205 = vsel %vm1179, %v1156, 0
        %v1208 = vsel %vm1179, %v1157, 0
        %v1211 = vsel %vm1179, %v1158, 0
        %v1214 = vsel %vm1179, %v1159, 0
        %v1217 = vsel %vm1179, %v1160, 0
        %v1220 = vsel %vm1179, %v1161, 0
        %v1223 = vsel %vm1179, %v1162, 0
        %v1226 = vsel %vm1179, %v1163, 0
        %1228 = vmatprep.subr.mxu0 0.0
        %1229 = vmatpush1.msra.mxu0 0.0
        %1230 = vmatprep.subr.mxu0 0.0
        %1231 = vmatpush1.msra.mxu0 0.0
        %1232 = vmatprep.subr.mxu0 0.0
        %1233 = vmatpush1.msra.mxu0 0.0
        %1234 = vmatprep.subr.mxu0 0.0
        %1235 = vmatpush1.msra.mxu0 0.0
        %1236 = vmatprep.subr.mxu0 0.0
        %1237 = vmatpush1.msra.mxu0 0.0
        %1238 = vmatprep.subr.mxu0 0.0
        %1239 = vmatpush1.msra.mxu0 0.0
        %1240 = vmatprep.subr.mxu0 0.0
        %1241 = vmatpush1.msra.mxu0 0.0
        %1242 = vmatprep.subr.mxu0 0.0
        %1243 = vmatpush1.msra.mxu0 0.0
        %1244 = vmatprep.subr.mxu0 0.0
        %1245 = vmatpush1.msra.mxu0 %v1171
        %1246 = vmatprep.subr.mxu0 0.0
        %1247 = vmatpush1.msra.mxu0 %v1170
        %1248 = vmatprep.subr.mxu0 0.0
        %1249 = vmatpush1.msra.mxu0 %v1169
        %1250 = vmatprep.subr.mxu0 0.0
        %1251 = vmatpush1.msra.mxu0 %v1168
        %1252 = vmatprep.subr.mxu0 0.0
        %1253 = vmatpush1.msra.mxu0 %v1167
        %1254 = vmatprep.subr.mxu0 0.0
        %1255 = vmatpush1.msra.mxu0 %v1166
        %1256 = vmatprep.subr.mxu0 0.0
        %1257 = vmatpush1.msra.mxu0 %v1165
        %1258 = vmatprep.subr.mxu0 0.0
        %1259 = vmatpush1.msra.mxu0 %v1164
        %1260 = vmatprep.subr.mxu0 0.0
        %1261 = vmatpush2.msra.mxu0 0.0
        %1262 = vmatprep.subr.mxu0 0.0
        %1263 = vmatpush2.msra.mxu0 0.0
        %1264 = vmatprep.subr.mxu0 0.0
        %1265 = vmatpush2.msra.mxu0 0.0
        %1266 = vmatprep.subr.mxu0 0.0
        %1267 = vmatpush2.msra.mxu0 0.0
        %1268 = vmatprep.subr.mxu0 0.0
        %1269 = vmatpush2.msra.mxu0 0.0
        %1270 = vmatprep.subr.mxu0 0.0
        %1271 = vmatpush2.msra.mxu0 0.0
        %1272 = vmatprep.subr.mxu0 0.0
        %1273 = vmatpush2.msra.mxu0 0.0
        %1274 = vmatprep.subr.mxu0 0.0
        %1275 = vmatpush2.msra.mxu0 0.0
        %1276 = vmatprep.subr.mxu0 0.0
        %1277 = vmatpush2.msra.mxu0 0.0
        %1278 = vmatprep.subr.mxu0 0.0
        %1279 = vmatpush2.msra.mxu0 0.0
        %1280 = vmatprep.subr.mxu0 0.0
        %1281 = vmatpush2.msra.mxu0 0.0
        %1282 = vmatprep.subr.mxu0 0.0
        %1283 = vmatpush2.msra.mxu0 0.0
        %1284 = vmatprep.subr.mxu0 0.0
        %1285 = vmatpush2.msra.mxu0 0.0
        %1286 = vmatprep.subr.mxu0 0.0
        %1287 = vmatpush2.msra.mxu0 0.0
        %1288 = vmatprep.subr.mxu0 0.0
        %1289 = vmatpush2.msra.mxu0 0.0
        %1290 = vmatprep.subr.mxu0 0.0
        %1291 = vmatpush2.msra.mxu0 0.0
        %1292 = vmatprep.mubr.f32.mxu0 0.0
        %1293 = vmatmul.mubr.f32.gmra.mxu0 %v1181
        %v1294 = vpop.f32.mrf.mxu0
        %v1295 = vadd.f32 %v1177, %v1294
        %v1296 = vpop.f32.mrf.mxu0
        %1297 = vmatprep.mubr.f32.mxu0 0.0
        %1298 = vmatmul.mubr.f32.gmra.mxu0 %v1184
        %v1299 = vpop.f32.mrf.mxu0
        %v1300 = vadd.f32 %v1177, %v1299
        %v1301 = vpop.f32.mrf.mxu0
        %1302 = vmatprep.mubr.f32.mxu0 0.0
        %1303 = vmatmul.mubr.f32.gmra.mxu0 %v1187
        %v1304 = vpop.f32.mrf.mxu0
        %v1305 = vadd.f32 %v1177, %v1304
        %v1306 = vpop.f32.mrf.mxu0
        %1307 = vmatprep.mubr.f32.mxu0 0.0
        %1308 = vmatmul.mubr.f32.gmra.mxu0 %v1190
        %v1309 = vpop.f32.mrf.mxu0
        %v1310 = vadd.f32 %v1177, %v1309
        %v1311 = vpop.f32.mrf.mxu0
        %1312 = vmatprep.mubr.f32.mxu0 0.0
        %1313 = vmatmul.mubr.f32.gmra.mxu0 %v1193
        %v1314 = vpop.f32.mrf.mxu0
        %v1315 = vadd.f32 %v1177, %v1314
        %v1316 = vpop.f32.mrf.mxu0
        %1317 = vmatprep.mubr.f32.mxu0 0.0
        %1318 = vmatmul.mubr.f32.gmra.mxu0 %v1196
        %v1319 = vpop.f32.mrf.mxu0
        %v1320 = vadd.f32 %v1177, %v1319
        %v1321 = vpop.f32.mrf.mxu0
        %1322 = vmatprep.mubr.f32.mxu0 0.0
        %1323 = vmatmul.mubr.f32.gmra.mxu0 %v1199
        %v1324 = vpop.f32.mrf.mxu0
        %v1325 = vadd.f32 %v1177, %v1324
        %v1326 = vpop.f32.mrf.mxu0
        %1327 = vmatprep.mubr.f32.mxu0 0.0
        %1328 = vmatmul.mubr.f32.gmra.mxu0 %v1202
        %v1329 = vpop.f32.mrf.mxu0
        %v1330 = vadd.f32 %v1177, %v1329
        %v1331 = vpop.f32.mrf.mxu0
        %1332 = vmatprep.mubr.f32.mxu0 0.0
        %1333 = vmatmul.mubr.f32.gmra.mxu0 %v1205
        %v1334 = vpop.f32.mrf.mxu0
        %v1335 = vadd.f32 %v1177, %v1334
        %v1336 = vpop.f32.mrf.mxu0
        %1337 = vmatprep.mubr.f32.mxu0 0.0
        %1338 = vmatmul.mubr.f32.gmra.mxu0 %v1208
        %v1339 = vpop.f32.mrf.mxu0
        %v1340 = vadd.f32 %v1177, %v1339
        %v1341 = vpop.f32.mrf.mxu0
        %1342 = vmatprep.mubr.f32.mxu0 0.0
        %1343 = vmatmul.mubr.f32.gmra.mxu0 %v1211
        %v1344 = vpop.f32.mrf.mxu0
        %v1345 = vadd.f32 %v1177, %v1344
        %v1346 = vpop.f32.mrf.mxu0
        %1347 = vmatprep.mubr.f32.mxu0 0.0
        %1348 = vmatmul.mubr.f32.gmra.mxu0 %v1214
        %v1349 = vpop.f32.mrf.mxu0
        %v1350 = vadd.f32 %v1177, %v1349
        %v1351 = vpop.f32.mrf.mxu0
        %1352 = vmatprep.mubr.f32.mxu0 0.0
        %1353 = vmatmul.mubr.f32.gmra.mxu0 %v1217
        %v1354 = vpop.f32.mrf.mxu0
        %v1355 = vadd.f32 %v1177, %v1354
        %v1356 = vpop.f32.mrf.mxu0
        %1357 = vmatprep.mubr.f32.mxu0 0.0
        %1358 = vmatmul.mubr.f32.gmra.mxu0 %v1220
        %v1359 = vpop.f32.mrf.mxu0
        %v1360 = vadd.f32 %v1177, %v1359
        %v1361 = vpop.f32.mrf.mxu0
        %1362 = vmatprep.mubr.f32.mxu0 0.0
        %1363 = vmatmul.mubr.f32.gmra.mxu0 %v1223
        %v1364 = vpop.f32.mrf.mxu0
        %v1365 = vadd.f32 %v1177, %v1364
        %v1366 = vpop.f32.mrf.mxu0
        %1367 = vmatprep.mubr.f32.mxu0 0.0
        %1368 = vmatmul.mubr.f32.gmra.mxu0 %v1226
        %v1369 = vpop.f32.mrf.mxu0
        %v1370 = vadd.f32 %v1177, %v1369
        %v1371 = vpop.f32.mrf.mxu0
        %1372 = vdwg.mxu0
        %v1373 = vmax.f32 %v1295, 0.0
        %v1374 = vmax.f32 %v1300, 0.0
        %v1375 = vmax.f32 %v1305, 0.0
        %v1376 = vmax.f32 %v1310, 0.0
        %v1377 = vmax.f32 %v1315, 0.0
        %v1378 = vmax.f32 %v1320, 0.0
        %v1379 = vmax.f32 %v1325, 0.0
        %v1380 = vmax.f32 %v1330, 0.0
        %v1381 = vmax.f32 %v1335, 0.0
        %v1382 = vmax.f32 %v1340, 0.0
        %v1383 = vmax.f32 %v1345, 0.0
        %v1384 = vmax.f32 %v1350, 0.0
        %v1385 = vmax.f32 %v1355, 0.0
        %v1386 = vmax.f32 %v1360, 0.0
        %v1387 = vmax.f32 %v1365, 0.0
        %v1388 = vmax.f32 %v1370, 0.0
        %v1389 = vld [vmem:[%s6] sm:$0x1]
        %v1390 = vld [vmem:[#allocation2] sm:$0x1]
        %1392 = vset.pattern.permute.xlu0 0
        %1393 = vperm.xlu0 %1392, %v1390
        %v1394 = vpop.permute.xlu0 %1393
        %v1396 = vlaneseq
        %v1397 = vshrl.u32 %v1396, 7
        %v1398 = vsub.s32 0, %v1397
        %v1399 = vrot.slane %v1394, %v1398
        %v1401 = vsel %vm1179, %v1389, 0
        %v1404 = vsel %vm1179, %v1373, 0
        %v1407 = vsel %vm1179, %v1374, 0
        %v1410 = vsel %vm1179, %v1375, 0
        %v1413 = vsel %vm1179, %v1376, 0
        %v1416 = vsel %vm1179, %v1377, 0
        %v1419 = vsel %vm1179, %v1378, 0
        %v1422 = vsel %vm1179, %v1379, 0
        %v1425 = vsel %vm1179, %v1380, 0
        %v1428 = vsel %vm1179, %v1381, 0
        %v1431 = vsel %vm1179, %v1382, 0
        %v1434 = vsel %vm1179, %v1383, 0
        %v1437 = vsel %vm1179, %v1384, 0
        %v1440 = vsel %vm1179, %v1385, 0
        %v1443 = vsel %vm1179, %v1386, 0
        %v1446 = vsel %vm1179, %v1387, 0
        %v1449 = vsel %vm1179, %v1388, 0
        %1451 = vmatprep.subr.mxu0 0.0
        %1452 = vmatpush1.xpose.msra.mxu0 %v1449
        %1453 = vmatprep.subr.mxu0 0.0
        %1454 = vmatpush1.xpose.msra.mxu0 %v1446
        %1455 = vmatprep.subr.mxu0 0.0
        %1456 = vmatpush1.xpose.msra.mxu0 %v1443
        %1457 = vmatprep.subr.mxu0 0.0
        %1458 = vmatpush1.xpose.msra.mxu0 %v1440
        %1459 = vmatprep.subr.mxu0 0.0
        %1460 = vmatpush1.xpose.msra.mxu0 %v1437
        %1461 = vmatprep.subr.mxu0 0.0
        %1462 = vmatpush1.xpose.msra.mxu0 %v1434
        %1463 = vmatprep.subr.mxu0 0.0
        %1464 = vmatpush1.xpose.msra.mxu0 %v1431
        %1465 = vmatprep.subr.mxu0 0.0
        %1466 = vmatpush1.xpose.msra.mxu0 %v1428
        %1467 = vmatprep.subr.mxu0 0.0
        %1468 = vmatpush1.xpose.msra.mxu0 %v1425
        %1469 = vmatprep.subr.mxu0 0.0
        %1470 = vmatpush1.xpose.msra.mxu0 %v1422
        %1471 = vmatprep.subr.mxu0 0.0
        %1472 = vmatpush1.xpose.msra.mxu0 %v1419
        %1473 = vmatprep.subr.mxu0 0.0
        %1474 = vmatpush1.xpose.msra.mxu0 %v1416
        %1475 = vmatprep.subr.mxu0 0.0
        %1476 = vmatpush1.xpose.msra.mxu0 %v1413
        %1477 = vmatprep.subr.mxu0 0.0
        %1478 = vmatpush1.xpose.msra.mxu0 %v1410
        %1479 = vmatprep.subr.mxu0 0.0
        %1480 = vmatpush1.xpose.msra.mxu0 %v1407
        %1481 = vmatprep.subr.mxu0 0.0
        %1482 = vmatpush1.xpose.msra.mxu0 %v1404
        %1483 = vmatprep.subr.mxu0 0.0
        %1484 = vmatpush2.xpose.msra.mxu0 0.0
        %1485 = vmatprep.subr.mxu0 0.0
        %1486 = vmatpush2.xpose.msra.mxu0 0.0
        %1487 = vmatprep.subr.mxu0 0.0
        %1488 = vmatpush2.xpose.msra.mxu0 0.0
        %1489 = vmatprep.subr.mxu0 0.0
        %1490 = vmatpush2.xpose.msra.mxu0 0.0
        %1491 = vmatprep.subr.mxu0 0.0
        %1492 = vmatpush2.xpose.msra.mxu0 0.0
        %1493 = vmatprep.subr.mxu0 0.0
        %1494 = vmatpush2.xpose.msra.mxu0 0.0
        %1495 = vmatprep.subr.mxu0 0.0
        %1496 = vmatpush2.xpose.msra.mxu0 0.0
        %1497 = vmatprep.subr.mxu0 0.0
        %1498 = vmatpush2.xpose.msra.mxu0 0.0
        %1499 = vmatprep.subr.mxu0 0.0
        %1500 = vmatpush2.xpose.msra.mxu0 0.0
        %1501 = vmatprep.subr.mxu0 0.0
        %1502 = vmatpush2.xpose.msra.mxu0 0.0
        %1503 = vmatprep.subr.mxu0 0.0
        %1504 = vmatpush2.xpose.msra.mxu0 0.0
        %1505 = vmatprep.subr.mxu0 0.0
        %1506 = vmatpush2.xpose.msra.mxu0 0.0
        %1507 = vmatprep.subr.mxu0 0.0
        %1508 = vmatpush2.xpose.msra.mxu0 0.0
        %1509 = vmatprep.subr.mxu0 0.0
        %1510 = vmatpush2.xpose.msra.mxu0 0.0
        %1511 = vmatprep.subr.mxu0 0.0
        %1512 = vmatpush2.xpose.msra.mxu0 0.0
        %1513 = vmatprep.subr.mxu0 0.0
        %1514 = vmatpush2.xpose.msra.mxu0 0.0
        %1515 = vmatprep.mubr.f32.mxu0 0.0
        %1516 = vmatmul.mubr.f32.gmra.mxu0 %v1401
        %v1517 = vpop.f32.mrf.mxu0
        %v1518 = vadd.f32 %v1399, %v1517
        %v1519 = vpop.f32.mrf.mxu0
        %1520 = vdwg.mxu0
        %1521 = vst [vmem:[%s300] sm:$0x1] %v1518
        %s1522 = sand.u32 %s205, 1
        %s1523 = scalar_lea.sflag [#allocation4], %s1522
        %s1524 = sand.u32 %s205, 1
        %s1525 = scalar_lea.vmem [#allocation3], %s1524
        // Predicated region
        $region53: #{posendf_forward.1} parent=51 // pred_check
          %p1526 = pneg %p215
        $region54: #{posendf_forward.1} parent=51 // pred_check_branch
          %1528 = sbr.rel (%p1526) target = $region56
        $region55: #{posendf_forward.1} parent=51 // pred_region
          %s1530 = ssub.s32 16, 16
          %1531 = vsyncadd %s1523, %s1530
          %s1532 = smul.addr %s24, 16
          %s1533 = scalar_lea.hbm %s8, %s1532
          %s1535 = sshll.u32 %s1525, 4
          %s1536 = int_to_ptr.vmem [resolvable:$true] %s1535
          %1538 = dma.vmem_to_hbm [thread:$0]  %s1536, 16, %s1533, %s1523
        $region56: #{posendf_forward.1} parent=51 // pred_fallthru
          _
      $region52: #{posendf_forward.1} parent=5 // pred_fallthru
        _
      %p1539 = scmp.le.s32.totalorder 2, %s19
      // Predicated region
      $region57: #{posendf_forward.1} parent=5 // pred_check
        %p1540 = pneg %p1539
      $region58: #{posendf_forward.1} parent=5 // pred_check_branch
        %1542 = sbr.rel (%p1540) target = $region60
      $region59: #{posendf_forward.1} parent=5 // pred_region
        %s1543 = ssub.s32 %s19, 2
        // Predicated region
        $region61: #{posendf_forward.1} parent=59 // pred_check
          %p1544 = pneg %p221
        $region62: #{posendf_forward.1} parent=59 // pred_check_branch
          %1546 = sbr.rel (%p1544) target = $region64
        $region63: #{posendf_forward.1} parent=59 // pred_region
          %s1547 = sand.u32 %s206, 1
          %s1548 = scalar_lea.sflag [#allocation4], %s1547
          %s1549 = sand.u32 %s206, 1
          %s1550 = scalar_lea.vmem [#allocation3], %s1549
          %1551 = dma.done %s1548, 16
        $region64: #{posendf_forward.1} parent=59 // pred_fallthru
          _
      $region60: #{posendf_forward.1} parent=5 // pred_fallthru
        _
    $region6: #{posendf_forward.1} parent=1 // loop_footer
      %s23 = sadd.s32 1, %s19
    $region7: #{posendf_forward.1} parent=1 // loop_footer_branch
      %18 = sbr.rel target = $region3
    $region8: #{posendf_forward.1} parent=1 // loop_exit
      _
    %1552 = vsyncpa [#allocation4], 1
    %s1553 = scalar_lea.sflag [#allocation4], 1
    %1554 = vsyncpa %s1553, 1

</llo_original>
